<compile_context>
chip_gen: v7x
topology: tpu7x:2x2x1
jax: 0.10.0
libtpu: 0.0.40
codegen_flags: <defaults>
</compile_context>

<pallas_src>
import math

import jax
import jax.numpy as jnp
import numpy as np
from jax.experimental import pallas as pl
from jax.experimental.pallas import tpu as pltpu

NLATENT = 2   # fixed by PixelHNNAutoEncoder (self._nlatent = 2)


def _softplus(z):
    # torch.nn.Softplus(beta=1, threshold=20)
    return jnp.where(z > 20.0, z, jnp.log1p(jnp.exp(jnp.minimum(z, 20.0))))


def pixel_hnn_kernel(x_ref, w1_ref, b1_ref, w2_ref, w2t_ref, b2_ref, w3_ref,
                     out_ref):
    f32 = jnp.float32
    x = x_ref[...].astype(f32)       # (2, TB)   batch on lanes
    W1 = w1_ref[...].astype(f32)     # (H, 2)    torch (out, in) layout
    b1 = b1_ref[...].astype(f32)     # (H, 1)
    W2 = w2_ref[...].astype(f32)     # (H, H)
    W2t = w2t_ref[...].astype(f32)   # (H, H) = W2.T (pre-transposed in wrapper)
    b2 = b2_ref[...].astype(f32)     # (H, 1)
    w3 = w3_ref[...].astype(f32)     # (H, 1) = W3[1, :]  (F2 head; b3 has no grad)

    H = W1.shape[0]
    TB = x.shape[1]

    w1c0 = W1[:, 0:1]                # (H, 1) = W1[:, 0]
    w1c1 = W1[:, 1:2]                # (H, 1) = W1[:, 1]

    # ---- layer 1: the K=2 contraction is done on the VPU, not the MXU ----
    z1 = w1c0 * x[0:1, :] + w1c1 * x[1:2, :] + b1                    # (H, TB)
    # shared exp for softplus(z1) and sigmoid(z1)   (Softplus threshold = 20)
    e1 = jnp.exp(jnp.minimum(z1, 20.0))
    s1 = e1 / (1.0 + e1)                                             # softplus'(z1)
    h1 = jnp.where(z1 > 20.0, z1, jnp.log1p(e1))                     # softplus(z1)

    # ---- layer 2: dense (H,H) x (H,TB) MXU matmul, N = TB on lanes ----
    z2 = jnp.dot(W2, h1, preferred_element_type=f32) + b2            # (H, TB)
    e2 = jnp.exp(jnp.minimum(z2, 20.0))
    s2 = e2 / (1.0 + e2)                                             # softplus'(z2)

    # ---- analytic reverse sweep: dF2/dx ----
    a = w3 * s2                                                      # (H, TB)
    u = jnp.dot(W2t, a, preferred_element_type=f32)                  # W2^T a
    g = u * s1                                                       # (H, TB)
    # N=2 output contraction as sublane reductions (VPU + XLU), not the MXU
    dF2_0 = jnp.sum(w1c0 * g, axis=0, keepdims=True)                 # (1, TB)
    dF2_1 = jnp.sum(w1c1 * g, axis=0, keepdims=True)                 # (1, TB)

    # ---- Hessian of F2: both directional products fused into one pass ----
    s1p = s1 * (1.0 - s1)
    s2p = s2 * (1.0 - s2)
    ws2p = w3 * s2p                                                  # (H, TB)
    us1p = u * s1p                                                   # (H, TB)

    s1_2 = jnp.concatenate([s1, s1], axis=1)                         # (H, 2TB)
    dh1 = jnp.concatenate([s1 * w1c0, s1 * w1c1], axis=1)            # δh1, both dirs
    dz2 = jnp.dot(W2, dh1, preferred_element_type=f32)               # δz2
    da = jnp.concatenate([ws2p, ws2p], axis=1) * dz2                 # δ(w3 ⊙ sp'(z2))
    du = jnp.dot(W2t, da, preferred_element_type=f32)                # δu
    dg = du * s1_2 + jnp.concatenate([us1p * w1c0, us1p * w1c1], axis=1)

    Hr0 = jnp.sum(w1c0 * dg, axis=0, keepdims=True)                  # [H00 | H01]
    Hr1 = jnp.sum(w1c1 * dg, axis=0, keepdims=True)                  # [H10 | H11]
    H00, H01 = Hr0[:, :TB], Hr0[:, TB:]
    H10, H11 = Hr1[:, :TB], Hr1[:, TB:]

    # solenoidal field: M = [[0, 1], [-1, 0]]
    #   dx = M @ dF2 = [dF2_1, -dF2_0],   J = M @ Hess
    rows = (dF2_1, -dF2_0,              # dx rows
            H10, H11, -H00, -H01)       # jacobian rows, row-major [J00,J01,J10,J11]
    for i, r in enumerate(rows):
        out_ref[i:i + 1, :] = r.astype(out_ref.dtype)


def pixel_hnn_forward(x, params, *, block_b=512):
    """Returns (dx, jacobian) matching PixelHNNAutoEncoder.forward's return value
    and its self.jacobian buffer (field_type='solenoidal', compute_jacobian=True)."""
    B, n = x.shape
    assert n == NLATENT
    W1, b1, W2, b2, W3, b3 = params   # torch layouts: (H,2),(H,),(H,H),(H,),(2,H),(2,)
    H = W1.shape[0]

    # batch tile: multiple of 128 lanes; clamp so the ~dozen live (H, 2*TB) f32
    # temporaries stay well inside v7x's smaller scoped VMEM (32 MiB default).
    block_b = max(128, (int(block_b) // 128) * 128)
    max_cols = max(128, ((8 * 1024 * 1024) // (32 * H * 4)) // 128 * 128)
    block_b = min(block_b, max_cols)

    Bp = pl.cdiv(B, block_b) * block_b
    xt = jnp.asarray(x).T                             # (2, B)  -- glue transpose
    if Bp != B:
        xt = jnp.pad(xt, ((0, 0), (0, Bp - B)))

    # parameter glue (no compute)
    W1a = jnp.asarray(W1)                             # (H, 2)
    b1c = jnp.asarray(b1).reshape(H, 1)
    W2a = jnp.asarray(W2)                             # (H, H)
    W2t = W2a.T                                       # (H, H)
    b2c = jnp.asarray(b2).reshape(H, 1)
    w3c = jnp.asarray(W3)[1, :].reshape(H, 1)         # F2 head (b3 has zero grad)
    # TODO(synk): only the default 'solenoidal' field_type is implemented; the
    # 'conservative' branch (W3[0,:] head + identity instead of M) and the
    # norm=True branch (reads norm.txt) are not wired up.

    grid = (Bp // block_b,)
    flops = int(12 * H * H * Bp + 40 * H * Bp)
    transcendentals = int(3 * H * Bp)
    bytes_accessed = int((2 + 6) * Bp * 4 + (2 * H * H + 4 * H + 2 * H) * 4)

    out = pl.pallas_call(
        pixel_hnn_kernel,
        out_shape=jax.ShapeDtypeStruct((6, Bp), x.dtype),
        grid=grid,
        in_specs=[
            pl.BlockSpec((NLATENT, block_b), lambda i: (0, i)),  # x tile, batch on lanes
            pl.BlockSpec((H, NLATENT), lambda i: (0, 0)),        # W1 (whole)
            pl.BlockSpec((H, 1), lambda i: (0, 0)),              # b1
            pl.BlockSpec((H, H), lambda i: (0, 0)),              # W2
            pl.BlockSpec((H, H), lambda i: (0, 0)),              # W2.T
            pl.BlockSpec((H, 1), lambda i: (0, 0)),              # b2
            pl.BlockSpec((H, 1), lambda i: (0, 0)),              # W3[1,:]
        ],
        out_specs=pl.BlockSpec((6, block_b), lambda i: (0, i)),
        compiler_params=pltpu.CompilerParams(dimension_semantics=("parallel",)),
        cost_estimate=pl.CostEstimate(flops=flops,
                                      transcendentals=transcendentals,
                                      bytes_accessed=bytes_accessed),
    )(xt, W1a, b1c, W2a, W2t, b2c, w3c)

    out_t = out[:, :B].T                              # (B, 6) -- glue
    dx = out_t[:, :NLATENT]
    jac = out_t[:, NLATENT:].reshape(B, NLATENT, NLATENT)
    return dx, jac


# ---------------- pure-JAX reference (autodiff, for verification) ----------------
def _reference(x, params):
    W1, b1, W2, b2, W3, b3 = params
    M = jnp.array([[0.0, 1.0], [-1.0, 0.0]], dtype=x.dtype)

    def mlp(xs):  # xs: (2,)
        h = _softplus(xs @ W1.T + b1)
        h = _softplus(h @ W2.T + b2)
        return h @ W3.T + b3

    def f2(xs):
        return mlp(xs)[1]

    def dx_single(xs):
        return jax.grad(f2)(xs) @ M.T

    dx = jax.vmap(dx_single)(x)
    jac = jax.vmap(jax.jacfwd(dx_single))(x)  # jac[i, a, b] = d dx_a / d x_b
    return dx, jac


def init_params(key, nhid):
    """Deterministic torch-Linear-style init (uniform +-1/sqrt(fan_in))."""
    def lin(k, fan_in, fan_out):
        bound = 1.0 / math.sqrt(fan_in)
        kw, kb = jax.random.split(k)
        W = jax.random.uniform(kw, (fan_out, fan_in), jnp.float32, -bound, bound)
        b = jax.random.uniform(kb, (fan_out,), jnp.float32, -bound, bound)
        return W, b

    k1, k2, k3 = jax.random.split(key, 3)
    W1, b1 = lin(k1, NLATENT, nhid)   # Linear(2, nhid)
    W2, b2 = lin(k2, nhid, nhid)      # Linear(nhid, nhid)
    W3, b3 = lin(k3, nhid, NLATENT)   # Linear(nhid, 2)
    # (The MLPAutoencoder parameters exist in __init__ but are unused in forward.)
    return W1, b1, W2, b2, W3, b3


if __name__ == "__main__":
    key = jax.random.PRNGKey(0)
    kx, kp = jax.random.split(key)

    B, nhid = 256, 32
    x = jax.random.normal(kx, (B, NLATENT), dtype=jnp.float32)
    params = init_params(kp, nhid)

    # block_b=128 at B=256 -> 2 grid steps (keeps both v7x TensorCores busy)
    dx, jac = pixel_hnn_forward(x, params, block_b=128)
    jax.block_until_ready((dx, jac))

    dx_ref, jac_ref = _reference(x, params)
    np.testing.assert_allclose(np.asarray(dx), np.asarray(dx_ref), rtol=5e-3, atol=1e-4)
    np.testing.assert_allclose(np.asarray(jac), np.asarray(jac_ref), rtol=5e-3, atol=1e-4)

    print("KERNEL_OK")
</pallas_src>

<mosaic_0001>
module attributes {stable_mosaic.version = 11 : i64} {
  func.func @pixel_hnn_kernel(%arg0: i32, %arg1: memref<2x128xf32, #tpu.memory_space<vmem>>, %arg2: memref<32x2xf32, #tpu.memory_space<vmem>>, %arg3: memref<32x1xf32, #tpu.memory_space<vmem>>, %arg4: memref<32x32xf32, #tpu.memory_space<vmem>>, %arg5: memref<32x32xf32, #tpu.memory_space<vmem>>, %arg6: memref<32x1xf32, #tpu.memory_space<vmem>>, %arg7: memref<32x1xf32, #tpu.memory_space<vmem>>, %arg8: memref<6x128xf32, #tpu.memory_space<vmem>>) attributes {dimension_semantics = [#tpu.dimension_semantics<parallel>], iteration_bounds = array<i64: 2>, scalar_prefetch = 0 : i64, scratch_operands = 0 : i64, tpu.core_type = #tpu.core_type<tc>, window_params = [{transform_indices = @transform_0, window_bounds = array<i64: 2, 128>}, {pipeline_mode = #tpu.pipeline_mode<synchronous>, transform_indices = @transform_1, window_bounds = array<i64: 32, 2>}, {pipeline_mode = #tpu.pipeline_mode<synchronous>, transform_indices = @transform_2, window_bounds = array<i64: 32, 1>}, {pipeline_mode = #tpu.pipeline_mode<synchronous>, transform_indices = @transform_3, window_bounds = array<i64: 32, 32>}, {pipeline_mode = #tpu.pipeline_mode<synchronous>, transform_indices = @transform_4, window_bounds = array<i64: 32, 32>}, {pipeline_mode = #tpu.pipeline_mode<synchronous>, transform_indices = @transform_5, window_bounds = array<i64: 32, 1>}, {pipeline_mode = #tpu.pipeline_mode<synchronous>, transform_indices = @transform_6, window_bounds = array<i64: 32, 1>}, {transform_indices = @transform_7, window_bounds = array<i64: 6, 128>}]} {
    %c0 = arith.constant 0 : index
    %c0_0 = arith.constant 0 : index
    %0 = vector.load %arg1[%c0, %c0_0] : memref<2x128xf32, #tpu.memory_space<vmem>>, vector<2x128xf32>
    %c0_1 = arith.constant 0 : index
    %c0_2 = arith.constant 0 : index
    %1 = vector.load %arg2[%c0_1, %c0_2] : memref<32x2xf32, #tpu.memory_space<vmem>>, vector<32x2xf32>
    %c0_3 = arith.constant 0 : index
    %c0_4 = arith.constant 0 : index
    %2 = vector.load %arg3[%c0_3, %c0_4] : memref<32x1xf32, #tpu.memory_space<vmem>>, vector<32x1xf32>
    %c0_5 = arith.constant 0 : index
    %c0_6 = arith.constant 0 : index
    %3 = vector.load %arg4[%c0_5, %c0_6] : memref<32x32xf32, #tpu.memory_space<vmem>>, vector<32x32xf32>
    %c0_7 = arith.constant 0 : index
    %c0_8 = arith.constant 0 : index
    %4 = vector.load %arg5[%c0_7, %c0_8] : memref<32x32xf32, #tpu.memory_space<vmem>>, vector<32x32xf32>
    %c0_9 = arith.constant 0 : index
    %c0_10 = arith.constant 0 : index
    %5 = vector.load %arg6[%c0_9, %c0_10] : memref<32x1xf32, #tpu.memory_space<vmem>>, vector<32x1xf32>
    %c0_11 = arith.constant 0 : index
    %c0_12 = arith.constant 0 : index
    %6 = vector.load %arg7[%c0_11, %c0_12] : memref<32x1xf32, #tpu.memory_space<vmem>>, vector<32x1xf32>
    %7 = vector.extract_strided_slice %1 {offsets = [0, 0], sizes = [32, 1], strides = [1, 1]} : vector<32x2xf32> to vector<32x1xf32>
    %8 = vector.extract_strided_slice %1 {offsets = [0, 1], sizes = [32, 1], strides = [1, 1]} : vector<32x2xf32> to vector<32x1xf32>
    %9 = vector.extract_strided_slice %0 {offsets = [0, 0], sizes = [1, 128], strides = [1, 1]} : vector<2x128xf32> to vector<1x128xf32>
    %10 = vector.broadcast %7 : vector<32x1xf32> to vector<32x128xf32>
    %11 = vector.broadcast %9 : vector<1x128xf32> to vector<32x128xf32>
    %12 = arith.mulf %10, %11 : vector<32x128xf32>
    %13 = vector.extract_strided_slice %0 {offsets = [1, 0], sizes = [1, 128], strides = [1, 1]} : vector<2x128xf32> to vector<1x128xf32>
    %14 = vector.broadcast %8 : vector<32x1xf32> to vector<32x128xf32>
    %15 = vector.broadcast %13 : vector<1x128xf32> to vector<32x128xf32>
    %16 = arith.mulf %14, %15 : vector<32x128xf32>
    %17 = arith.addf %12, %16 : vector<32x128xf32>
    %18 = vector.broadcast %2 : vector<32x1xf32> to vector<32x128xf32>
    %19 = arith.addf %17, %18 : vector<32x128xf32>
    %cst = arith.constant 2.000000e+01 : f32
    %20 = vector.broadcast %cst : f32 to vector<32x128xf32>
    %21 = arith.minimumf %19, %20 : vector<32x128xf32>
    %22 = math.exp %21 : vector<32x128xf32>
    %cst_13 = arith.constant 1.000000e+00 : f32
    %23 = vector.broadcast %cst_13 : f32 to vector<32x128xf32>
    %24 = arith.addf %23, %22 : vector<32x128xf32>
    %25 = arith.divf %22, %24 : vector<32x128xf32>
    %cst_14 = arith.constant 2.000000e+01 : f32
    %26 = vector.broadcast %cst_14 : f32 to vector<32x128xf32>
    %27 = arith.cmpf ogt, %19, %26 : vector<32x128xf32>
    %28 = math.log1p %22 : vector<32x128xf32>
    %29 = arith.select %27, %19, %28 : vector<32x128xi1>, vector<32x128xf32>
    %cst_15 = arith.constant dense<0.000000e+00> : vector<32x128xf32>
    %30 = tpu.matmul %3, %29, %cst_15 {dimension_numbers = #tpu.dot_dimension_numbers<[1], [0], [0], [1], [0, 0, 1, 1], [], []>} : vector<32x32xf32>, vector<32x128xf32>, vector<32x128xf32> -> vector<32x128xf32>
    %31 = vector.broadcast %5 : vector<32x1xf32> to vector<32x128xf32>
    %32 = arith.addf %30, %31 : vector<32x128xf32>
    %cst_16 = arith.constant 2.000000e+01 : f32
    %33 = vector.broadcast %cst_16 : f32 to vector<32x128xf32>
    %34 = arith.minimumf %32, %33 : vector<32x128xf32>
    %35 = math.exp %34 : vector<32x128xf32>
    %cst_17 = arith.constant 1.000000e+00 : f32
    %36 = vector.broadcast %cst_17 : f32 to vector<32x128xf32>
    %37 = arith.addf %36, %35 : vector<32x128xf32>
    %38 = arith.divf %35, %37 : vector<32x128xf32>
    %39 = vector.broadcast %6 : vector<32x1xf32> to vector<32x128xf32>
    %40 = arith.mulf %39, %38 : vector<32x128xf32>
    %cst_18 = arith.constant dense<0.000000e+00> : vector<32x128xf32>
    %41 = tpu.matmul %4, %40, %cst_18 {dimension_numbers = #tpu.dot_dimension_numbers<[1], [0], [0], [1], [0, 0, 1, 1], [], []>} : vector<32x32xf32>, vector<32x128xf32>, vector<32x128xf32> -> vector<32x128xf32>
    %42 = arith.mulf %41, %25 : vector<32x128xf32>
    %43 = vector.broadcast %7 : vector<32x1xf32> to vector<32x128xf32>
    %44 = arith.mulf %43, %42 : vector<32x128xf32>
    %cst_19 = arith.constant dense<0.000000e+00> : vector<128xf32>
    %45 = vector.multi_reduction <add>, %44, %cst_19 [0] : vector<32x128xf32> to vector<128xf32>
    %46 = vector.shape_cast %45 : vector<128xf32> to vector<1x128xf32>
    %47 = vector.broadcast %8 : vector<32x1xf32> to vector<32x128xf32>
    %48 = arith.mulf %47, %42 : vector<32x128xf32>
    %cst_20 = arith.constant dense<0.000000e+00> : vector<128xf32>
    %49 = vector.multi_reduction <add>, %48, %cst_20 [0] : vector<32x128xf32> to vector<128xf32>
    %50 = vector.shape_cast %49 : vector<128xf32> to vector<1x128xf32>
    %cst_21 = arith.constant 1.000000e+00 : f32
    %51 = vector.broadcast %cst_21 : f32 to vector<32x128xf32>
    %52 = arith.subf %51, %25 : vector<32x128xf32>
    %53 = arith.mulf %25, %52 : vector<32x128xf32>
    %cst_22 = arith.constant 1.000000e+00 : f32
    %54 = vector.broadcast %cst_22 : f32 to vector<32x128xf32>
    %55 = arith.subf %54, %38 : vector<32x128xf32>
    %56 = arith.mulf %38, %55 : vector<32x128xf32>
    %57 = vector.broadcast %6 : vector<32x1xf32> to vector<32x128xf32>
    %58 = arith.mulf %57, %56 : vector<32x128xf32>
    %59 = arith.mulf %41, %53 : vector<32x128xf32>
    %60 = tpu.concatenate %25, %25 in 1 : vector<32x128xf32>, vector<32x128xf32> -> vector<32x256xf32>
    %61 = vector.broadcast %7 : vector<32x1xf32> to vector<32x128xf32>
    %62 = arith.mulf %25, %61 : vector<32x128xf32>
    %63 = vector.broadcast %8 : vector<32x1xf32> to vector<32x128xf32>
    %64 = arith.mulf %25, %63 : vector<32x128xf32>
    %65 = tpu.concatenate %62, %64 in 1 : vector<32x128xf32>, vector<32x128xf32> -> vector<32x256xf32>
    %cst_23 = arith.constant dense<0.000000e+00> : vector<32x256xf32>
    %66 = tpu.matmul %3, %65, %cst_23 {dimension_numbers = #tpu.dot_dimension_numbers<[1], [0], [0], [1], [0, 0, 1, 1], [], []>} : vector<32x32xf32>, vector<32x256xf32>, vector<32x256xf32> -> vector<32x256xf32>
    %67 = tpu.concatenate %58, %58 in 1 : vector<32x128xf32>, vector<32x128xf32> -> vector<32x256xf32>
    %68 = arith.mulf %67, %66 : vector<32x256xf32>
    %cst_24 = arith.constant dense<0.000000e+00> : vector<32x256xf32>
    %69 = tpu.matmul %4, %68, %cst_24 {dimension_numbers = #tpu.dot_dimension_numbers<[1], [0], [0], [1], [0, 0, 1, 1], [], []>} : vector<32x32xf32>, vector<32x256xf32>, vector<32x256xf32> -> vector<32x256xf32>
    %70 = arith.mulf %69, %60 : vector<32x256xf32>
    %71 = vector.broadcast %7 : vector<32x1xf32> to vector<32x128xf32>
    %72 = arith.mulf %59, %71 : vector<32x128xf32>
    %73 = vector.broadcast %8 : vector<32x1xf32> to vector<32x128xf32>
    %74 = arith.mulf %59, %73 : vector<32x128xf32>
    %75 = tpu.concatenate %72, %74 in 1 : vector<32x128xf32>, vector<32x128xf32> -> vector<32x256xf32>
    %76 = arith.addf %70, %75 : vector<32x256xf32>
    %77 = vector.broadcast %7 : vector<32x1xf32> to vector<32x256xf32>
    %78 = arith.mulf %77, %76 : vector<32x256xf32>
    %cst_25 = arith.constant dense<0.000000e+00> : vector<256xf32>
    %79 = vector.multi_reduction <add>, %78, %cst_25 [0] : vector<32x256xf32> to vector<256xf32>
    %80 = vector.shape_cast %79 : vector<256xf32> to vector<1x256xf32>
    %81 = vector.broadcast %8 : vector<32x1xf32> to vector<32x256xf32>
    %82 = arith.mulf %81, %76 : vector<32x256xf32>
    %cst_26 = arith.constant dense<0.000000e+00> : vector<256xf32>
    %83 = vector.multi_reduction <add>, %82, %cst_26 [0] : vector<32x256xf32> to vector<256xf32>
    %84 = vector.shape_cast %83 : vector<256xf32> to vector<1x256xf32>
    %85 = vector.extract_strided_slice %80 {offsets = [0, 0], sizes = [1, 128], strides = [1, 1]} : vector<1x256xf32> to vector<1x128xf32>
    %86 = vector.extract_strided_slice %80 {offsets = [0, 128], sizes = [1, 128], strides = [1, 1]} : vector<1x256xf32> to vector<1x128xf32>
    %87 = vector.extract_strided_slice %84 {offsets = [0, 0], sizes = [1, 128], strides = [1, 1]} : vector<1x256xf32> to vector<1x128xf32>
    %88 = vector.extract_strided_slice %84 {offsets = [0, 128], sizes = [1, 128], strides = [1, 1]} : vector<1x256xf32> to vector<1x128xf32>
    %cst_27 = arith.constant 0.000000e+00 : f32
    %89 = vector.broadcast %cst_27 : f32 to vector<1x128xf32>
    %90 = arith.subf %89, %46 : vector<1x128xf32>
    %cst_28 = arith.constant 0.000000e+00 : f32
    %91 = vector.broadcast %cst_28 : f32 to vector<1x128xf32>
    %92 = arith.subf %91, %85 : vector<1x128xf32>
    %cst_29 = arith.constant 0.000000e+00 : f32
    %93 = vector.broadcast %cst_29 : f32 to vector<1x128xf32>
    %94 = arith.subf %93, %86 : vector<1x128xf32>
    %c0_30 = arith.constant 0 : index
    %c0_31 = arith.constant 0 : index
    %95 = vector.load %arg8[%c0_30, %c0_31] : memref<6x128xf32, #tpu.memory_space<vmem>>, vector<1x128xf32>
    tpu.vector_store %arg8[%c0_30, %c0_31], %50 {strides = array<i32>} : memref<6x128xf32, #tpu.memory_space<vmem>>, vector<1x128xf32>,
    %c1 = arith.constant 1 : index
    %c0_32 = arith.constant 0 : index
    %96 = vector.load %arg8[%c1, %c0_32] : memref<6x128xf32, #tpu.memory_space<vmem>>, vector<1x128xf32>
    tpu.vector_store %arg8[%c1, %c0_32], %90 {strides = array<i32>} : memref<6x128xf32, #tpu.memory_space<vmem>>, vector<1x128xf32>,
    %c2 = arith.constant 2 : index
    %c0_33 = arith.constant 0 : index
    %97 = vector.load %arg8[%c2, %c0_33] : memref<6x128xf32, #tpu.memory_space<vmem>>, vector<1x128xf32>
    tpu.vector_store %arg8[%c2, %c0_33], %87 {strides = array<i32>} : memref<6x128xf32, #tpu.memory_space<vmem>>, vector<1x128xf32>,
    %c3 = arith.constant 3 : index
    %c0_34 = arith.constant 0 : index
    %98 = vector.load %arg8[%c3, %c0_34] : memref<6x128xf32, #tpu.memory_space<vmem>>, vector<1x128xf32>
    tpu.vector_store %arg8[%c3, %c0_34], %88 {strides = array<i32>} : memref<6x128xf32, #tpu.memory_space<vmem>>, vector<1x128xf32>,
    %c4 = arith.constant 4 : index
    %c0_35 = arith.constant 0 : index
    %99 = vector.load %arg8[%c4, %c0_35] : memref<6x128xf32, #tpu.memory_space<vmem>>, vector<1x128xf32>
    tpu.vector_store %arg8[%c4, %c0_35], %92 {strides = array<i32>} : memref<6x128xf32, #tpu.memory_space<vmem>>, vector<1x128xf32>,
    %c5 = arith.constant 5 : index
    %c0_36 = arith.constant 0 : index
    %100 = vector.load %arg8[%c5, %c0_36] : memref<6x128xf32, #tpu.memory_space<vmem>>, vector<1x128xf32>
    tpu.vector_store %arg8[%c5, %c0_36], %94 {strides = array<i32>} : memref<6x128xf32, #tpu.memory_space<vmem>>, vector<1x128xf32>,
    return
  }
  func.func @transform_0(%arg0: i32) -> (i32, i32) {
    %c0_i32 = arith.constant 0 : i32
    %c0_i32_0 = arith.constant 0 : i32
    return %c0_i32, %arg0 : i32, i32
  }
  func.func @transform_1(%arg0: i32) -> (i32, i32) {
    %c0_i32 = arith.constant 0 : i32
    %c0_i32_0 = arith.constant 0 : i32
    %c0_i32_1 = arith.constant 0 : i32
    return %c0_i32, %c0_i32_0 : i32, i32
  }
  func.func @transform_2(%arg0: i32) -> (i32, i32) {
    %c0_i32 = arith.constant 0 : i32
    %c0_i32_0 = arith.constant 0 : i32
    %c0_i32_1 = arith.constant 0 : i32
    return %c0_i32, %c0_i32_0 : i32, i32
  }
  func.func @transform_3(%arg0: i32) -> (i32, i32) {
    %c0_i32 = arith.constant 0 : i32
    %c0_i32_0 = arith.constant 0 : i32
    %c0_i32_1 = arith.constant 0 : i32
    return %c0_i32, %c0_i32_0 : i32, i32
  }
  func.func @transform_4(%arg0: i32) -> (i32, i32) {
    %c0_i32 = arith.constant 0 : i32
    %c0_i32_0 = arith.constant 0 : i32
    %c0_i32_1 = arith.constant 0 : i32
    return %c0_i32, %c0_i32_0 : i32, i32
  }
  func.func @transform_5(%arg0: i32) -> (i32, i32) {
    %c0_i32 = arith.constant 0 : i32
    %c0_i32_0 = arith.constant 0 : i32
    %c0_i32_1 = arith.constant 0 : i32
    return %c0_i32, %c0_i32_0 : i32, i32
  }
  func.func @transform_6(%arg0: i32) -> (i32, i32) {
    %c0_i32 = arith.constant 0 : i32
    %c0_i32_0 = arith.constant 0 : i32
    %c0_i32_1 = arith.constant 0 : i32
    return %c0_i32, %c0_i32_0 : i32, i32
  }
  func.func @transform_7(%arg0: i32) -> (i32, i32) {
    %c0_i32 = arith.constant 0 : i32
    %c0_i32_0 = arith.constant 0 : i32
    return %c0_i32, %arg0 : i32, i32
  }
}

</mosaic_0001>

<llo_original>
// kernel: tpu_custom_call.1
$region0: #{tpu_custom_call.1}
  #allocation0 [shape = 'u32[]', space=smem, size = 0x4, offset = 0x4, fixed_abs, tag = 'smem constant byte address 0x4 - core index']
  #allocation1 [shape = 'u32[144,128]{1,0:T(1,128)}', space=vmem, size = 0x12000, scoped, tag = 'internal scratch']
  %s0 = inlined_call_operand.vmem [shape: f32[2,256], index: 0, kind: input, shape index: {}]
  %s1 = inlined_call_operand.vmem [shape: f32[32,2], index: 1, kind: input, shape index: {}]
  %s2 = inlined_call_operand.vmem [shape: f32[32,1], index: 2, kind: input, shape index: {}]
  %s3 = inlined_call_operand.vmem [shape: f32[32,32], index: 3, kind: input, shape index: {}]
  %s4 = inlined_call_operand.vmem [shape: f32[32,32], index: 4, kind: input, shape index: {}]
  %s5 = inlined_call_operand.vmem [shape: f32[32,1], index: 5, kind: input, shape index: {}]
  %s6 = inlined_call_operand.vmem [shape: f32[32,1], index: 6, kind: input, shape index: {}]
  %s7 = inlined_call_operand.hbm [shape: f32[6,256], index: 7, kind: output, shape index: {}]
  %s8 = sld [smem:[#allocation0]]
  $region61: #{tpu_custom_call.1} parent=0
    _
  %s10 = ssub.s32 1, %s8
  %s11 = scalar_select 0, %s10, %s8
  $region1: #{tpu_custom_call.1} parent=0
    #allocation2 [shape = 'u8[8192]{0}', space=vmem, size = 0x2000, scoped, tag = 'output window, operand 0']
    #allocation3 [shape = 's32[2]{0}', space=sflag, size = 0x8, scoped, tag = 'scoped memory for tpu_custom_call.1']
    %12 = vsyncpa [#allocation3], 0
    %s13 = scalar_lea.sflag [#allocation3], 1
    %14 = vsyncpa %s13, 0
    loop: start=0, step=1, limit=4
    $region2: #{tpu_custom_call.1} parent=1 // loop_pre_header
      _
    $region3: #{tpu_custom_call.1} parent=1 // loop_header
      %s16 = sphi 0, %s20
      %p17 = scmp.ge.s32.totalorder %s16, 4
      %s26 = sphi 0, %s28
      %s29 = sphi 0, %s26
      %s30 = sphi 0, %s29
      %s46 = sphi 0, %s30
      %s50 = sphi 0, %s50
      %s52 = sphi 0, %s50
      %s53 = sphi 0, %s52
      %s67 = sphi 0, %s53
      %s71 = sphi 0, %s71
      %s73 = sphi 0, %s71
      %s74 = sphi 0, %s73
      %s88 = sphi 0, %s74
      %s92 = sphi 0, %s92
      %s94 = sphi 0, %s92
      %s95 = sphi 0, %s94
      %s109 = sphi 0, %s95
      %s113 = sphi 0, %s113
      %s115 = sphi 0, %s113
      %s116 = sphi 0, %s115
      %s130 = sphi 0, %s116
      %s134 = sphi 0, %s134
      %s136 = sphi 0, %s134
      %s137 = sphi 0, %s136
      %s151 = sphi 0, %s137
      %s155 = sphi 0, %s155
      %s157 = sphi 0, %s155
      %s158 = sphi 0, %s157
      %s172 = sphi 0, %s158
      %s178 = sphi 0, %s180
      %s181 = sphi 0, %s178
      %s182 = sphi 0, %s181
      %s198 = sphi 0, %s182
    $region4: #{tpu_custom_call.1} parent=1 // loop_header_branch
      %19 = sbr.rel (%p17) target = $region8
    $region5: #{tpu_custom_call.1} parent=1 // loop_body
      %s21 = ssub.s32 %s16, 1
      %s22 = ssub.s32 %s16, 2
      %s23 = sadd.s32 %s16, 1
      %s24 = ssub.s32 %s16, %s23
      %p25 = scmp.eq.s32.totalorder %s24, 0
      %s27 = sadd.s32 %s26, 1
      %s28 = scalar_select %p25, %s26, %s27
      %p31 = pneg %p25
      %p32 = scmp.eq.s32.totalorder %s16, 1
      %p33 = por %p31, %p32
      %p34 = scmp.ne.s32.totalorder %s26, %s29
      %p35 = scmp.eq.s32.totalorder %s16, 0
      %p36 = por %p34, %p35
      %p37 = scmp.ne.s32.totalorder %s26, %s29
      %p38 = scmp.eq.s32.totalorder %s21, 1
      %p39 = por %p37, %p38
      %p40 = scmp.ne.s32.totalorder %s29, %s30
      %p41 = scmp.eq.s32.totalorder %s21, 0
      %p42 = por %p40, %p41
      %p43 = scmp.ne.s32.totalorder %s29, %s30
      %p44 = scmp.eq.s32.totalorder %s22, 1
      %p45 = por %p43, %p44
      %p47 = scmp.ne.s32.totalorder %s30, %s46
      %p48 = scmp.eq.s32.totalorder %s22, 0
      %p49 = por %p47, %p48
      %s51 = sadd.s32 %s50, 1
      %p54 = scmp.eq.s32.totalorder %s16, 1
      %p55 = scmp.ne.s32.totalorder %s50, %s52
      %p56 = scmp.eq.s32.totalorder %s16, 0
      %p57 = por %p55, %p56
      %p58 = scmp.ne.s32.totalorder %s50, %s52
      %p59 = scmp.eq.s32.totalorder %s21, 1
      %p60 = por %p58, %p59
      %p61 = scmp.ne.s32.totalorder %s52, %s53
      %p62 = scmp.eq.s32.totalorder %s21, 0
      %p63 = por %p61, %p62
      %p64 = scmp.ne.s32.totalorder %s52, %s53
      %p65 = scmp.eq.s32.totalorder %s22, 1
      %p66 = por %p64, %p65
      %p68 = scmp.ne.s32.totalorder %s53, %s67
      %p69 = scmp.eq.s32.totalorder %s22, 0
      %p70 = por %p68, %p69
      %s72 = sadd.s32 %s71, 1
      %p75 = scmp.eq.s32.totalorder %s16, 1
      %p76 = scmp.ne.s32.totalorder %s71, %s73
      %p77 = scmp.eq.s32.totalorder %s16, 0
      %p78 = por %p76, %p77
      %p79 = scmp.ne.s32.totalorder %s71, %s73
      %p80 = scmp.eq.s32.totalorder %s21, 1
      %p81 = por %p79, %p80
      %p82 = scmp.ne.s32.totalorder %s73, %s74
      %p83 = scmp.eq.s32.totalorder %s21, 0
      %p84 = por %p82, %p83
      %p85 = scmp.ne.s32.totalorder %s73, %s74
      %p86 = scmp.eq.s32.totalorder %s22, 1
      %p87 = por %p85, %p86
      %p89 = scmp.ne.s32.totalorder %s74, %s88
      %p90 = scmp.eq.s32.totalorder %s22, 0
      %p91 = por %p89, %p90
      %s93 = sadd.s32 %s92, 1
      %p96 = scmp.eq.s32.totalorder %s16, 1
      %p97 = scmp.ne.s32.totalorder %s92, %s94
      %p98 = scmp.eq.s32.totalorder %s16, 0
      %p99 = por %p97, %p98
      %p100 = scmp.ne.s32.totalorder %s92, %s94
      %p101 = scmp.eq.s32.totalorder %s21, 1
      %p102 = por %p100, %p101
      %p103 = scmp.ne.s32.totalorder %s94, %s95
      %p104 = scmp.eq.s32.totalorder %s21, 0
      %p105 = por %p103, %p104
      %p106 = scmp.ne.s32.totalorder %s94, %s95
      %p107 = scmp.eq.s32.totalorder %s22, 1
      %p108 = por %p106, %p107
      %p110 = scmp.ne.s32.totalorder %s95, %s109
      %p111 = scmp.eq.s32.totalorder %s22, 0
      %p112 = por %p110, %p111
      %s114 = sadd.s32 %s113, 1
      %p117 = scmp.eq.s32.totalorder %s16, 1
      %p118 = scmp.ne.s32.totalorder %s113, %s115
      %p119 = scmp.eq.s32.totalorder %s16, 0
      %p120 = por %p118, %p119
      %p121 = scmp.ne.s32.totalorder %s113, %s115
      %p122 = scmp.eq.s32.totalorder %s21, 1
      %p123 = por %p121, %p122
      %p124 = scmp.ne.s32.totalorder %s115, %s116
      %p125 = scmp.eq.s32.totalorder %s21, 0
      %p126 = por %p124, %p125
      %p127 = scmp.ne.s32.totalorder %s115, %s116
      %p128 = scmp.eq.s32.totalorder %s22, 1
      %p129 = por %p127, %p128
      %p131 = scmp.ne.s32.totalorder %s116, %s130
      %p132 = scmp.eq.s32.totalorder %s22, 0
      %p133 = por %p131, %p132
      %s135 = sadd.s32 %s134, 1
      %p138 = scmp.eq.s32.totalorder %s16, 1
      %p139 = scmp.ne.s32.totalorder %s134, %s136
      %p140 = scmp.eq.s32.totalorder %s16, 0
      %p141 = por %p139, %p140
      %p142 = scmp.ne.s32.totalorder %s134, %s136
      %p143 = scmp.eq.s32.totalorder %s21, 1
      %p144 = por %p142, %p143
      %p145 = scmp.ne.s32.totalorder %s136, %s137
      %p146 = scmp.eq.s32.totalorder %s21, 0
      %p147 = por %p145, %p146
      %p148 = scmp.ne.s32.totalorder %s136, %s137
      %p149 = scmp.eq.s32.totalorder %s22, 1
      %p150 = por %p148, %p149
      %p152 = scmp.ne.s32.totalorder %s137, %s151
      %p153 = scmp.eq.s32.totalorder %s22, 0
      %p154 = por %p152, %p153
      %s156 = sadd.s32 %s155, 1
      %p159 = scmp.eq.s32.totalorder %s16, 1
      %p160 = scmp.ne.s32.totalorder %s155, %s157
      %p161 = scmp.eq.s32.totalorder %s16, 0
      %p162 = por %p160, %p161
      %p163 = scmp.ne.s32.totalorder %s155, %s157
      %p164 = scmp.eq.s32.totalorder %s21, 1
      %p165 = por %p163, %p164
      %p166 = scmp.ne.s32.totalorder %s157, %s158
      %p167 = scmp.eq.s32.totalorder %s21, 0
      %p168 = por %p166, %p167
      %p169 = scmp.ne.s32.totalorder %s157, %s158
      %p170 = scmp.eq.s32.totalorder %s22, 1
      %p171 = por %p169, %p170
      %p173 = scmp.ne.s32.totalorder %s158, %s172
      %p174 = scmp.eq.s32.totalorder %s22, 0
      %p175 = por %p173, %p174
      %s176 = ssub.s32 %s16, %s23
      %p177 = scmp.eq.s32.totalorder %s176, 0
      %s179 = sadd.s32 %s178, 1
      %s180 = scalar_select %p177, %s178, %s179
      %p183 = pneg %p177
      %p184 = scmp.eq.s32.totalorder %s16, 1
      %p185 = por %p183, %p184
      %p186 = scmp.ne.s32.totalorder %s178, %s181
      %p187 = scmp.eq.s32.totalorder %s16, 0
      %p188 = por %p186, %p187
      %p189 = scmp.ne.s32.totalorder %s178, %s181
      %p190 = scmp.eq.s32.totalorder %s21, 1
      %p191 = por %p189, %p190
      %p192 = scmp.ne.s32.totalorder %s181, %s182
      %p193 = scmp.eq.s32.totalorder %s21, 0
      %p194 = por %p192, %p193
      %p195 = scmp.ne.s32.totalorder %s181, %s182
      %p196 = scmp.eq.s32.totalorder %s22, 1
      %p197 = por %p195, %p196
      %p199 = scmp.ne.s32.totalorder %s182, %s198
      %p200 = scmp.eq.s32.totalorder %s22, 0
      %p201 = por %p199, %p200
      %p202 = scmp.le.s32.totalorder 1, %s16
      %p203 = scmp.lt.s32.totalorder %s16, 3
      %p204 = pnand %p202, %p203
      %p205 = pneg %p204
      // Predicated region
      $region9: #{tpu_custom_call.1} parent=5 // pred_check
        _
      $region10: #{tpu_custom_call.1} parent=5 // pred_check_branch
        %207 = sbr.rel (%p204) target = $region12
      $region11: #{tpu_custom_call.1} parent=5 // pred_region
        %s208 = ssub.s32 %s16, 1
        // Predicated region
        $region13: #{tpu_custom_call.1} parent=11 // pred_check
          %p209 = pneg %p63
        $region14: #{tpu_custom_call.1} parent=11 // pred_check_branch
          %211 = sbr.rel (%p209) target = $region16
        $region15: #{tpu_custom_call.1} parent=11 // pred_region
          _
        $region16: #{tpu_custom_call.1} parent=11 // pred_fallthru
          _
        // Predicated region
        $region17: #{tpu_custom_call.1} parent=11 // pred_check
          %p212 = pneg %p84
        $region18: #{tpu_custom_call.1} parent=11 // pred_check_branch
          %214 = sbr.rel (%p212) target = $region20
        $region19: #{tpu_custom_call.1} parent=11 // pred_region
          _
        $region20: #{tpu_custom_call.1} parent=11 // pred_fallthru
          _
        // Predicated region
        $region21: #{tpu_custom_call.1} parent=11 // pred_check
          %p215 = pneg %p105
        $region22: #{tpu_custom_call.1} parent=11 // pred_check_branch
          %217 = sbr.rel (%p215) target = $region24
        $region23: #{tpu_custom_call.1} parent=11 // pred_region
          _
        $region24: #{tpu_custom_call.1} parent=11 // pred_fallthru
          _
        // Predicated region
        $region25: #{tpu_custom_call.1} parent=11 // pred_check
          %p218 = pneg %p126
        $region26: #{tpu_custom_call.1} parent=11 // pred_check_branch
          %220 = sbr.rel (%p218) target = $region28
        $region27: #{tpu_custom_call.1} parent=11 // pred_region
          _
        $region28: #{tpu_custom_call.1} parent=11 // pred_fallthru
          _
        // Predicated region
        $region29: #{tpu_custom_call.1} parent=11 // pred_check
          %p221 = pneg %p147
        $region30: #{tpu_custom_call.1} parent=11 // pred_check_branch
          %223 = sbr.rel (%p221) target = $region32
        $region31: #{tpu_custom_call.1} parent=11 // pred_region
          _
        $region32: #{tpu_custom_call.1} parent=11 // pred_fallthru
          _
        // Predicated region
        $region33: #{tpu_custom_call.1} parent=11 // pred_check
          %p224 = pneg %p168
        $region34: #{tpu_custom_call.1} parent=11 // pred_check_branch
          %226 = sbr.rel (%p224) target = $region36
        $region35: #{tpu_custom_call.1} parent=11 // pred_region
          _
        $region36: #{tpu_custom_call.1} parent=11 // pred_fallthru
          _
      $region12: #{tpu_custom_call.1} parent=5 // pred_fallthru
        _
      %p227 = scmp.lt.s32.totalorder %s16, 2
      // Predicated region
      $region37: #{tpu_custom_call.1} parent=5 // pred_check
        %p228 = pneg %p227
      $region38: #{tpu_custom_call.1} parent=5 // pred_check_branch
        %230 = sbr.rel (%p228) target = $region40
      $region39: #{tpu_custom_call.1} parent=5 // pred_region
        // Predicated region
        $region41: #{tpu_custom_call.1} parent=39 // pred_check
          %p231 = pneg %p36
        $region42: #{tpu_custom_call.1} parent=39 // pred_check_branch
          %233 = sbr.rel (%p231) target = $region44
        $region43: #{tpu_custom_call.1} parent=39 // pred_region
          %p234 = scmp.lt.s32.totalorder %s16, 1
          %s235 = scalar_select %p234, %s16, 1
          %s236 = smul.addr %s235, 2
          %s237 = scalar_lea.vmem %s0, %s236
        $region44: #{tpu_custom_call.1} parent=39 // pred_fallthru
          _
      $region40: #{tpu_custom_call.1} parent=5 // pred_fallthru
        _
      %p238 = scmp.le.s32.totalorder 1, %s16
      %p239 = scmp.lt.s32.totalorder %s16, 3
      %p240 = pnand %p238, %p239
      %p241 = pneg %p240
      // Predicated region
      $region45: #{tpu_custom_call.1} parent=5 // pred_check
        _
      $region46: #{tpu_custom_call.1} parent=5 // pred_check_branch
        %243 = sbr.rel (%p240) target = $region48
      $region47: #{tpu_custom_call.1} parent=5 // pred_region
        %s244 = ssub.s32 %s16, 1
        %p245 = scmp.lt.s32.totalorder %s21, 1
        %s246 = scalar_select %p245, %s21, 1
        %s247 = smul.addr %s246, 2
        %s248 = scalar_lea.vmem %s0, %s247
        %p249 = pneg %p42
        %p250 = pneg %p39
        %p251 = pneg %p63
        %p252 = pneg %p60
        %p253 = pneg %p84
        %p254 = pneg %p81
        %p255 = pneg %p105
        %p256 = pneg %p102
        %p257 = pneg %p126
        %p258 = pneg %p123
        %p259 = pneg %p147
        %p260 = pneg %p144
        %p261 = pneg %p168
        %p262 = pneg %p165
        %p263 = pneg %p194
        %p264 = pneg %p191
        %s265 = sand.u32 %s181, 1
        %s266 = scalar_lea.sflag [#allocation3], %s265
        %s267 = sand.u32 %s181, 1
        %s268 = smul.addr %s267, 8
        %s269 = scalar_lea.vmem [#allocation2], %s268
        %p270 = scmp.lt.s32.totalorder %s21, 1
        %s271 = scalar_select %p270, %s21, 1
        %s272 = smul.addr %s271, 2
        %s273 = scalar_lea.vmem %s0, %s272
        %v274 = vld [vmem:[%s273] sm:$0x3]
        %v275 = vld [vmem:[%s1] sm:$0xff]
        %v276 = vld [vmem:[%s1 + $0x8] sm:$0xff]
        %v277 = vld [vmem:[%s1 + $0x10] sm:$0xff]
        %v278 = vld [vmem:[%s1 + $0x18] sm:$0xff]
        %v279 = vld [vmem:[%s2] sm:$0xff]
        %v280 = vld [vmem:[%s2 + $0x8] sm:$0xff]
        %v281 = vld [vmem:[%s2 + $0x10] sm:$0xff]
        %v282 = vld [vmem:[%s2 + $0x18] sm:$0xff]
        %v283 = vld [vmem:[%s3] sm:$0xff]
        %v284 = vld [vmem:[%s3 + $0x8] sm:$0xff]
        %v285 = vld [vmem:[%s3 + $0x10] sm:$0xff]
        %v286 = vld [vmem:[%s3 + $0x18] sm:$0xff]
        %v287 = vld [vmem:[%s4] sm:$0xff]
        %v288 = vld [vmem:[%s4 + $0x8] sm:$0xff]
        %v289 = vld [vmem:[%s4 + $0x10] sm:$0xff]
        %v290 = vld [vmem:[%s4 + $0x18] sm:$0xff]
        %v291 = vld [vmem:[%s5] sm:$0xff]
        %v292 = vld [vmem:[%s5 + $0x8] sm:$0xff]
        %v293 = vld [vmem:[%s5 + $0x10] sm:$0xff]
        %v294 = vld [vmem:[%s5 + $0x18] sm:$0xff]
        %v295 = vld [vmem:[%s6] sm:$0xff]
        %v296 = vld [vmem:[%s6 + $0x8] sm:$0xff]
        %v297 = vld [vmem:[%s6 + $0x10] sm:$0xff]
        %v298 = vld [vmem:[%s6 + $0x18] sm:$0xff]
        %300 = vset.pattern.permute.xlu0 0
        %301 = vperm.xlu0 %300, %v275
        %v302 = vpop.permute.xlu0 %301
        %305 = vset.pattern.permute.xlu0 0
        %306 = vperm.xlu0 %305, %v276
        %v307 = vpop.permute.xlu0 %306
        %310 = vset.pattern.permute.xlu0 0
        %311 = vperm.xlu0 %310, %v277
        %v312 = vpop.permute.xlu0 %311
        %315 = vset.pattern.permute.xlu0 0
        %316 = vperm.xlu0 %315, %v278
        %v317 = vpop.permute.xlu0 %316
        %v319 = vlaneseq
        %v320 = vshrl.u32 %v319, 7
        %v321 = vsub.s32 0, %v320
        %v322 = vrot.slane %v274, %v321
        %v323 = vmul.f32 %v302, %v322
        %v324 = vmul.f32 %v307, %v322
        %v325 = vmul.f32 %v312, %v322
        %v326 = vmul.f32 %v317, %v322
        %327 = vset.pattern.permute.xlu0 1
        %328 = vperm.xlu0 %327, %v275
        %v329 = vpop.permute.xlu0 %328
        %331 = vset.pattern.permute.xlu0 1
        %332 = vperm.xlu0 %331, %v276
        %v333 = vpop.permute.xlu0 %332
        %335 = vset.pattern.permute.xlu0 1
        %336 = vperm.xlu0 %335, %v277
        %v337 = vpop.permute.xlu0 %336
        %339 = vset.pattern.permute.xlu0 1
        %340 = vperm.xlu0 %339, %v278
        %v341 = vpop.permute.xlu0 %340
        %v343 = vlaneseq
        %v344 = vshrl.u32 %v343, 7
        %v345 = vsub.s32 1, %v344
        %v346 = vrot.slane %v274, %v345
        %v347 = vmul.f32 %v329, %v346
        %v348 = vmul.f32 %v333, %v346
        %v349 = vmul.f32 %v337, %v346
        %v350 = vmul.f32 %v341, %v346
        %v351 = vadd.f32 %v323, %v347
        %v352 = vadd.f32 %v324, %v348
        %v353 = vadd.f32 %v325, %v349
        %v354 = vadd.f32 %v326, %v350
        %356 = vset.pattern.permute.xlu0 0
        %357 = vperm.xlu0 %356, %v279
        %v358 = vpop.permute.xlu0 %357
        %361 = vset.pattern.permute.xlu0 0
        %362 = vperm.xlu0 %361, %v280
        %v363 = vpop.permute.xlu0 %362
        %366 = vset.pattern.permute.xlu0 0
        %367 = vperm.xlu0 %366, %v281
        %v368 = vpop.permute.xlu0 %367
        %371 = vset.pattern.permute.xlu0 0
        %372 = vperm.xlu0 %371, %v282
        %v373 = vpop.permute.xlu0 %372
        %v375 = vadd.f32 %v351, %v358
        %v376 = vadd.f32 %v352, %v363
        %v377 = vadd.f32 %v353, %v368
        %v378 = vadd.f32 %v354, %v373
        %v379 = vmin.f32 %v375, 20.0
        %v380 = vmin.f32 %v376, 20.0
        %v381 = vmin.f32 %v377, 20.0
        %v382 = vmin.f32 %v378, 20.0
        %v383 = vmul.f32 %v379, 1.442695
        %v384 = vpow.pop %v383
        %v385 = vmul.f32 %v380, 1.442695
        %v386 = vpow.pop %v385
        %v387 = vmul.f32 %v381, 1.442695
        %v388 = vpow.pop %v387
        %v389 = vmul.f32 %v382, 1.442695
        %v390 = vpow.pop %v389
        %v391 = vadd.f32 %v384, 1.0
        %v392 = vadd.f32 %v386, 1.0
        %v393 = vadd.f32 %v388, 1.0
        %v394 = vadd.f32 %v390, 1.0
        %v395 = vrcp.pop %v391
        %v396 = vmul.f32 %v384, %v395
        %v397 = vrcp.pop %v392
        %v398 = vmul.f32 %v386, %v397
        %v399 = vrcp.pop %v393
        %v400 = vmul.f32 %v388, %v399
        %v401 = vrcp.pop %v394
        %v402 = vmul.f32 %v390, %v401
        %vm403 = vcmp.gt.f32.partialorder %v375, 20.0
        %vm404 = vcmp.gt.f32.partialorder %v376, 20.0
        %vm405 = vcmp.gt.f32.partialorder %v377, 20.0
        %vm406 = vcmp.gt.f32.partialorder %v378, 20.0
        %v407 = vadd.f32 %v384, 1.0
        %v408 = vlog2.pop %v407
        %v409 = vmul.f32 %v408, 0.6931472
        %v410 = vmul.f32 -0.5, %v384
        %v411 = vadd.f32 %v410, 1.0
        %v412 = vmul.f32 %v411, %v384
        %v413 = vand.u32 2147483647, %v384
        %vm414 = vcmp.lt.f32.partialorder %v413, 0.0004427343
        %v415 = vsel %vm414, %v412, %v409
        %v416 = vadd.f32 %v386, 1.0
        %v417 = vlog2.pop %v416
        %v418 = vmul.f32 %v417, 0.6931472
        %v419 = vmul.f32 -0.5, %v386
        %v420 = vadd.f32 %v419, 1.0
        %v421 = vmul.f32 %v420, %v386
        %v422 = vand.u32 2147483647, %v386
        %vm423 = vcmp.lt.f32.partialorder %v422, 0.0004427343
        %v424 = vsel %vm423, %v421, %v418
        %v425 = vadd.f32 %v388, 1.0
        %v426 = vlog2.pop %v425
        %v427 = vmul.f32 %v426, 0.6931472
        %v428 = vmul.f32 -0.5, %v388
        %v429 = vadd.f32 %v428, 1.0
        %v430 = vmul.f32 %v429, %v388
        %v431 = vand.u32 2147483647, %v388
        %vm432 = vcmp.lt.f32.partialorder %v431, 0.0004427343
        %v433 = vsel %vm432, %v430, %v427
        %v434 = vadd.f32 %v390, 1.0
        %v435 = vlog2.pop %v434
        %v436 = vmul.f32 %v435, 0.6931472
        %v437 = vmul.f32 -0.5, %v390
        %v438 = vadd.f32 %v437, 1.0
        %v439 = vmul.f32 %v438, %v390
        %v440 = vand.u32 2147483647, %v390
        %vm441 = vcmp.lt.f32.partialorder %v440, 0.0004427343
        %v442 = vsel %vm441, %v439, %v436
        %v443 = vsel %vm403, %v375, %v415
        %v444 = vsel %vm404, %v376, %v424
        %v445 = vsel %vm405, %v377, %v433
        %v446 = vsel %vm406, %v378, %v442
        %448 = vset.pattern.permute.xlu0 0
        %449 = vperm.xlu0 %448, %v291
        %v450 = vpop.permute.xlu0 %449
        %453 = vset.pattern.permute.xlu0 0
        %454 = vperm.xlu0 %453, %v292
        %v455 = vpop.permute.xlu0 %454
        %458 = vset.pattern.permute.xlu0 0
        %459 = vperm.xlu0 %458, %v293
        %v460 = vpop.permute.xlu0 %459
        %463 = vset.pattern.permute.xlu0 0
        %464 = vperm.xlu0 %463, %v294
        %v465 = vpop.permute.xlu0 %464
        %vm467 = vcmask 261120
        %v469 = vsel %vm467, %v283, 0
        %v472 = vsel %vm467, %v284, 0
        %v475 = vsel %vm467, %v285, 0
        %v478 = vsel %vm467, %v286, 0
        %480 = vmatprep.subr.mxu0 0.0
        %481 = vmatpush1.msra.mxu0 %v443
        %482 = vmatprep.subr.mxu0 0.0
        %483 = vmatpush1.msra.mxu0 %v444
        %484 = vmatprep.subr.mxu0 0.0
        %485 = vmatpush1.msra.mxu0 %v445
        %486 = vmatprep.subr.mxu0 0.0
        %487 = vmatpush1.msra.mxu0 %v446
        %488 = vmatprep.subr.mxu0 0.0
        %489 = vmatpush1.msra.mxu0 0.0
        %490 = vmatprep.subr.mxu0 0.0
        %491 = vmatpush1.msra.mxu0 0.0
        %492 = vmatprep.subr.mxu0 0.0
        %493 = vmatpush1.msra.mxu0 0.0
        %494 = vmatprep.subr.mxu0 0.0
        %495 = vmatpush1.msra.mxu0 0.0
        %496 = vmatprep.subr.mxu0 0.0
        %497 = vmatpush1.msra.mxu0 0.0
        %498 = vmatprep.subr.mxu0 0.0
        %499 = vmatpush1.msra.mxu0 0.0
        %500 = vmatprep.subr.mxu0 0.0
        %501 = vmatpush1.msra.mxu0 0.0
        %502 = vmatprep.subr.mxu0 0.0
        %503 = vmatpush1.msra.mxu0 0.0
        %504 = vmatprep.subr.mxu0 0.0
        %505 = vmatpush1.msra.mxu0 0.0
        %506 = vmatprep.subr.mxu0 0.0
        %507 = vmatpush1.msra.mxu0 0.0
        %508 = vmatprep.subr.mxu0 0.0
        %509 = vmatpush1.msra.mxu0 0.0
        %510 = vmatprep.subr.mxu0 0.0
        %511 = vmatpush1.msra.mxu0 0.0
        %512 = vmatprep.subr.mxu0 0.0
        %513 = vmatpush1.msra.mxu0 0.0
        %514 = vmatprep.subr.mxu0 0.0
        %515 = vmatpush1.msra.mxu0 0.0
        %516 = vmatprep.subr.mxu0 0.0
        %517 = vmatpush1.msra.mxu0 0.0
        %518 = vmatprep.subr.mxu0 0.0
        %519 = vmatpush1.msra.mxu0 0.0
        %520 = vmatprep.subr.mxu0 0.0
        %521 = vmatpush1.msra.mxu0 0.0
        %522 = vmatprep.subr.mxu0 0.0
        %523 = vmatpush1.msra.mxu0 0.0
        %524 = vmatprep.subr.mxu0 0.0
        %525 = vmatpush1.msra.mxu0 0.0
        %526 = vmatprep.subr.mxu0 0.0
        %527 = vmatpush1.msra.mxu0 0.0
        %528 = vmatprep.subr.mxu0 0.0
        %529 = vmatpush1.msra.mxu0 0.0
        %530 = vmatprep.subr.mxu0 0.0
        %531 = vmatpush1.msra.mxu0 0.0
        %532 = vmatprep.subr.mxu0 0.0
        %533 = vmatpush1.msra.mxu0 0.0
        %534 = vmatprep.subr.mxu0 0.0
        %535 = vmatpush1.msra.mxu0 0.0
        %536 = vmatprep.subr.mxu0 0.0
        %537 = vmatpush1.msra.mxu0 0.0
        %538 = vmatprep.subr.mxu0 0.0
        %539 = vmatpush1.msra.mxu0 0.0
        %540 = vmatprep.subr.mxu0 0.0
        %541 = vmatpush1.msra.mxu0 0.0
        %542 = vmatprep.subr.mxu0 0.0
        %543 = vmatpush1.msra.mxu0 0.0
        %544 = vmatprep.mubr.f32.mxu0 0.0
        %545 = vmatmul.mubr.f32.gmra.mrb[0].mxu0 %v469
        %v546 = vpop.f32.mrb[0].mxu0
        %v547 = vadd.f32 %v450, %v546
        %v548 = vpop.f32.mrb[0].mxu0
        %549 = vmatprep.mubr.f32.mxu0 0.0
        %550 = vmatmul.mubr.f32.gmra.mrb[0].mxu0 %v472
        %v551 = vpop.f32.mrb[0].mxu0
        %v552 = vadd.f32 %v455, %v551
        %v553 = vpop.f32.mrb[0].mxu0
        %554 = vmatprep.mubr.f32.mxu0 0.0
        %555 = vmatmul.mubr.f32.gmra.mrb[0].mxu0 %v475
        %v556 = vpop.f32.mrb[0].mxu0
        %v557 = vadd.f32 %v460, %v556
        %v558 = vpop.f32.mrb[0].mxu0
        %559 = vmatprep.mubr.f32.mxu0 0.0
        %560 = vmatmul.mubr.f32.gmra.mrb[0].mxu0 %v478
        %v561 = vpop.f32.mrb[0].mxu0
        %v562 = vadd.f32 %v465, %v561
        %v563 = vpop.f32.mrb[0].mxu0
        %564 = vdwg.mxu0
        %v565 = vmin.f32 %v547, 20.0
        %v566 = vmin.f32 %v552, 20.0
        %v567 = vmin.f32 %v557, 20.0
        %v568 = vmin.f32 %v562, 20.0
        %v569 = vmul.f32 %v565, 1.442695
        %v570 = vpow.pop %v569
        %v571 = vmul.f32 %v566, 1.442695
        %v572 = vpow.pop %v571
        %v573 = vmul.f32 %v567, 1.442695
        %v574 = vpow.pop %v573
        %v575 = vmul.f32 %v568, 1.442695
        %v576 = vpow.pop %v575
        %v577 = vadd.f32 %v570, 1.0
        %v578 = vadd.f32 %v572, 1.0
        %v579 = vadd.f32 %v574, 1.0
        %v580 = vadd.f32 %v576, 1.0
        %v581 = vrcp.pop %v577
        %v582 = vmul.f32 %v570, %v581
        %v583 = vrcp.pop %v578
        %v584 = vmul.f32 %v572, %v583
        %v585 = vrcp.pop %v579
        %v586 = vmul.f32 %v574, %v585
        %v587 = vrcp.pop %v580
        %v588 = vmul.f32 %v576, %v587
        %590 = vset.pattern.permute.xlu0 0
        %591 = vperm.xlu0 %590, %v295
        %v592 = vpop.permute.xlu0 %591
        %595 = vset.pattern.permute.xlu0 0
        %596 = vperm.xlu0 %595, %v296
        %v597 = vpop.permute.xlu0 %596
        %600 = vset.pattern.permute.xlu0 0
        %601 = vperm.xlu0 %600, %v297
        %v602 = vpop.permute.xlu0 %601
        %605 = vset.pattern.permute.xlu0 0
        %606 = vperm.xlu0 %605, %v298
        %v607 = vpop.permute.xlu0 %606
        %v609 = vmul.f32 %v592, %v582
        %v610 = vmul.f32 %v597, %v584
        %v611 = vmul.f32 %v602, %v586
        %v612 = vmul.f32 %v607, %v588
        %v614 = vsel %vm467, %v287, 0
        %v617 = vsel %vm467, %v288, 0
        %v620 = vsel %vm467, %v289, 0
        %v623 = vsel %vm467, %v290, 0
        %625 = vmatprep.subr.mxu0 0.0
        %626 = vmatpush1.msra.mxu0 %v609
        %627 = vmatprep.subr.mxu0 0.0
        %628 = vmatpush1.msra.mxu0 %v610
        %629 = vmatprep.subr.mxu0 0.0
        %630 = vmatpush1.msra.mxu0 %v611
        %631 = vmatprep.subr.mxu0 0.0
        %632 = vmatpush1.msra.mxu0 %v612
        %633 = vmatprep.subr.mxu0 0.0
        %634 = vmatpush1.msra.mxu0 0.0
        %635 = vmatprep.subr.mxu0 0.0
        %636 = vmatpush1.msra.mxu0 0.0
        %637 = vmatprep.subr.mxu0 0.0
        %638 = vmatpush1.msra.mxu0 0.0
        %639 = vmatprep.subr.mxu0 0.0
        %640 = vmatpush1.msra.mxu0 0.0
        %641 = vmatprep.subr.mxu0 0.0
        %642 = vmatpush1.msra.mxu0 0.0
        %643 = vmatprep.subr.mxu0 0.0
        %644 = vmatpush1.msra.mxu0 0.0
        %645 = vmatprep.subr.mxu0 0.0
        %646 = vmatpush1.msra.mxu0 0.0
        %647 = vmatprep.subr.mxu0 0.0
        %648 = vmatpush1.msra.mxu0 0.0
        %649 = vmatprep.subr.mxu0 0.0
        %650 = vmatpush1.msra.mxu0 0.0
        %651 = vmatprep.subr.mxu0 0.0
        %652 = vmatpush1.msra.mxu0 0.0
        %653 = vmatprep.subr.mxu0 0.0
        %654 = vmatpush1.msra.mxu0 0.0
        %655 = vmatprep.subr.mxu0 0.0
        %656 = vmatpush1.msra.mxu0 0.0
        %657 = vmatprep.subr.mxu0 0.0
        %658 = vmatpush1.msra.mxu0 0.0
        %659 = vmatprep.subr.mxu0 0.0
        %660 = vmatpush1.msra.mxu0 0.0
        %661 = vmatprep.subr.mxu0 0.0
        %662 = vmatpush1.msra.mxu0 0.0
        %663 = vmatprep.subr.mxu0 0.0
        %664 = vmatpush1.msra.mxu0 0.0
        %665 = vmatprep.subr.mxu0 0.0
        %666 = vmatpush1.msra.mxu0 0.0
        %667 = vmatprep.subr.mxu0 0.0
        %668 = vmatpush1.msra.mxu0 0.0
        %669 = vmatprep.subr.mxu0 0.0
        %670 = vmatpush1.msra.mxu0 0.0
        %671 = vmatprep.subr.mxu0 0.0
        %672 = vmatpush1.msra.mxu0 0.0
        %673 = vmatprep.subr.mxu0 0.0
        %674 = vmatpush1.msra.mxu0 0.0
        %675 = vmatprep.subr.mxu0 0.0
        %676 = vmatpush1.msra.mxu0 0.0
        %677 = vmatprep.subr.mxu0 0.0
        %678 = vmatpush1.msra.mxu0 0.0
        %679 = vmatprep.subr.mxu0 0.0
        %680 = vmatpush1.msra.mxu0 0.0
        %681 = vmatprep.subr.mxu0 0.0
        %682 = vmatpush1.msra.mxu0 0.0
        %683 = vmatprep.subr.mxu0 0.0
        %684 = vmatpush1.msra.mxu0 0.0
        %685 = vmatprep.subr.mxu0 0.0
        %686 = vmatpush1.msra.mxu0 0.0
        %687 = vmatprep.subr.mxu0 0.0
        %688 = vmatpush1.msra.mxu0 0.0
        %689 = vmatprep.mubr.f32.mxu0 0.0
        %690 = vmatmul.mubr.f32.gmra.mrb[0].mxu0 %v614
        %v691 = vpop.f32.mrb[0].mxu0
        %v692 = vadd.f32 0.0, %v691
        %v693 = vpop.f32.mrb[0].mxu0
        %694 = vmatprep.mubr.f32.mxu0 0.0
        %695 = vmatmul.mubr.f32.gmra.mrb[0].mxu0 %v617
        %v696 = vpop.f32.mrb[0].mxu0
        %v697 = vadd.f32 0.0, %v696
        %v698 = vpop.f32.mrb[0].mxu0
        %699 = vmatprep.mubr.f32.mxu0 0.0
        %700 = vmatmul.mubr.f32.gmra.mrb[0].mxu0 %v620
        %v701 = vpop.f32.mrb[0].mxu0
        %v702 = vadd.f32 0.0, %v701
        %v703 = vpop.f32.mrb[0].mxu0
        %704 = vmatprep.mubr.f32.mxu0 0.0
        %705 = vmatmul.mubr.f32.gmra.mrb[0].mxu0 %v623
        %v706 = vpop.f32.mrb[0].mxu0
        %v707 = vadd.f32 0.0, %v706
        %v708 = vpop.f32.mrb[0].mxu0
        %709 = vdwg.mxu0
        %v710 = vmul.f32 %v692, %v396
        %v711 = vmul.f32 %v697, %v398
        %v712 = vmul.f32 %v702, %v400
        %v713 = vmul.f32 %v707, %v402
        %v714 = vmul.f32 %v302, %v710
        %v715 = vmul.f32 %v307, %v711
        %v716 = vmul.f32 %v312, %v712
        %v717 = vmul.f32 %v317, %v713
        %v718 = vadd.f32 %v714, %v715
        %v719 = vadd.f32 %v718, %v716
        %v720 = vadd.f32 %v719, %v717
        %v721 = vrot.slane %v720, 4
        %v722 = vadd.f32 %v720, %v721
        %v723 = vrot.slane %v722, 2
        %v724 = vadd.f32 %v722, %v723
        %v725 = vrot.slane %v724, 1
        %v726 = vadd.f32 %v724, %v725
        %v727 = vmul.f32 %v329, %v710
        %v728 = vmul.f32 %v333, %v711
        %v729 = vmul.f32 %v337, %v712
        %v730 = vmul.f32 %v341, %v713
        %v731 = vadd.f32 %v727, %v728
        %v732 = vadd.f32 %v731, %v729
        %v733 = vadd.f32 %v732, %v730
        %v734 = vrot.slane %v733, 4
        %v735 = vadd.f32 %v733, %v734
        %v736 = vrot.slane %v735, 2
        %v737 = vadd.f32 %v735, %v736
        %v738 = vrot.slane %v737, 1
        %v739 = vadd.f32 %v737, %v738
        %v740 = vsub.f32 1.0, %v396
        %v741 = vsub.f32 1.0, %v398
        %v742 = vsub.f32 1.0, %v400
        %v743 = vsub.f32 1.0, %v402
        %v744 = vmul.f32 %v396, %v740
        %v745 = vmul.f32 %v398, %v741
        %v746 = vmul.f32 %v400, %v742
        %v747 = vmul.f32 %v402, %v743
        %v748 = vsub.f32 1.0, %v582
        %v749 = vsub.f32 1.0, %v584
        %v750 = vsub.f32 1.0, %v586
        %v751 = vsub.f32 1.0, %v588
        %v752 = vmul.f32 %v582, %v748
        %v753 = vmul.f32 %v584, %v749
        %v754 = vmul.f32 %v586, %v750
        %v755 = vmul.f32 %v588, %v751
        %v756 = vmul.f32 %v592, %v752
        %v757 = vmul.f32 %v597, %v753
        %v758 = vmul.f32 %v602, %v754
        %v759 = vmul.f32 %v607, %v755
        %v760 = vmul.f32 %v692, %v744
        %v761 = vmul.f32 %v697, %v745
        %v762 = vmul.f32 %v702, %v746
        %v763 = vmul.f32 %v707, %v747
        %v764 = vmul.f32 %v396, %v302
        %v765 = vmul.f32 %v398, %v307
        %v766 = vmul.f32 %v400, %v312
        %v767 = vmul.f32 %v402, %v317
        %v768 = vmul.f32 %v396, %v329
        %v769 = vmul.f32 %v398, %v333
        %v770 = vmul.f32 %v400, %v337
        %v771 = vmul.f32 %v402, %v341
        %772 = vmatprep.subr.mxu0 %v768
        %773 = vmatpush1.msra.mxu0 %v764
        %774 = vmatprep.subr.mxu0 %v769
        %775 = vmatpush1.msra.mxu0 %v765
        %776 = vmatprep.subr.mxu0 %v770
        %777 = vmatpush1.msra.mxu0 %v766
        %778 = vmatprep.subr.mxu0 %v771
        %779 = vmatpush1.msra.mxu0 %v767
        %780 = vmatprep.subr.mxu0 0.0
        %781 = vmatpush1.msra.mxu0 0.0
        %782 = vmatprep.subr.mxu0 0.0
        %783 = vmatpush1.msra.mxu0 0.0
        %784 = vmatprep.subr.mxu0 0.0
        %785 = vmatpush1.msra.mxu0 0.0
        %786 = vmatprep.subr.mxu0 0.0
        %787 = vmatpush1.msra.mxu0 0.0
        %788 = vmatprep.subr.mxu0 0.0
        %789 = vmatpush1.msra.mxu0 0.0
        %790 = vmatprep.subr.mxu0 0.0
        %791 = vmatpush1.msra.mxu0 0.0
        %792 = vmatprep.subr.mxu0 0.0
        %793 = vmatpush1.msra.mxu0 0.0
        %794 = vmatprep.subr.mxu0 0.0
        %795 = vmatpush1.msra.mxu0 0.0
        %796 = vmatprep.subr.mxu0 0.0
        %797 = vmatpush1.msra.mxu0 0.0
        %798 = vmatprep.subr.mxu0 0.0
        %799 = vmatpush1.msra.mxu0 0.0
        %800 = vmatprep.subr.mxu0 0.0
        %801 = vmatpush1.msra.mxu0 0.0
        %802 = vmatprep.subr.mxu0 0.0
        %803 = vmatpush1.msra.mxu0 0.0
        %804 = vmatprep.subr.mxu0 0.0
        %805 = vmatpush1.msra.mxu0 0.0
        %806 = vmatprep.subr.mxu0 0.0
        %807 = vmatpush1.msra.mxu0 0.0
        %808 = vmatprep.subr.mxu0 0.0
        %809 = vmatpush1.msra.mxu0 0.0
        %810 = vmatprep.subr.mxu0 0.0
        %811 = vmatpush1.msra.mxu0 0.0
        %812 = vmatprep.subr.mxu0 0.0
        %813 = vmatpush1.msra.mxu0 0.0
        %814 = vmatprep.subr.mxu0 0.0
        %815 = vmatpush1.msra.mxu0 0.0
        %816 = vmatprep.subr.mxu0 0.0
        %817 = vmatpush1.msra.mxu0 0.0
        %818 = vmatprep.subr.mxu0 0.0
        %819 = vmatpush1.msra.mxu0 0.0
        %820 = vmatprep.subr.mxu0 0.0
        %821 = vmatpush1.msra.mxu0 0.0
        %822 = vmatprep.subr.mxu0 0.0
        %823 = vmatpush1.msra.mxu0 0.0
        %824 = vmatprep.subr.mxu0 0.0
        %825 = vmatpush1.msra.mxu0 0.0
        %826 = vmatprep.subr.mxu0 0.0
        %827 = vmatpush1.msra.mxu0 0.0
        %828 = vmatprep.subr.mxu0 0.0
        %829 = vmatpush1.msra.mxu0 0.0
        %830 = vmatprep.subr.mxu0 0.0
        %831 = vmatpush1.msra.mxu0 0.0
        %832 = vmatprep.subr.mxu0 0.0
        %833 = vmatpush1.msra.mxu0 0.0
        %834 = vmatprep.subr.mxu0 0.0
        %835 = vmatpush1.msra.mxu0 0.0
        %836 = vmatprep.mubr.f32.mxu0 0.0
        %837 = vmatmul.mubr.f32.gmra.mrb[0].mxu0 %v469
        %v838 = vpop.f32.mrb[0].mxu0
        %v839 = vadd.f32 0.0, %v838
        %v840 = vpop.f32.mrb[0].mxu0
        %v841 = vadd.f32 0.0, %v840
        %842 = vmatprep.mubr.f32.mxu0 0.0
        %843 = vmatmul.mubr.f32.gmra.mrb[0].mxu0 %v472
        %v844 = vpop.f32.mrb[0].mxu0
        %v845 = vadd.f32 0.0, %v844
        %v846 = vpop.f32.mrb[0].mxu0
        %v847 = vadd.f32 0.0, %v846
        %848 = vmatprep.mubr.f32.mxu0 0.0
        %849 = vmatmul.mubr.f32.gmra.mrb[0].mxu0 %v475
        %v850 = vpop.f32.mrb[0].mxu0
        %v851 = vadd.f32 0.0, %v850
        %v852 = vpop.f32.mrb[0].mxu0
        %v853 = vadd.f32 0.0, %v852
        %854 = vmatprep.mubr.f32.mxu0 0.0
        %855 = vmatmul.mubr.f32.gmra.mrb[0].mxu0 %v478
        %v856 = vpop.f32.mrb[0].mxu0
        %v857 = vadd.f32 0.0, %v856
        %v858 = vpop.f32.mrb[0].mxu0
        %v859 = vadd.f32 0.0, %v858
        %860 = vdwg.mxu0
        %v861 = vmul.f32 %v756, %v839
        %v862 = vmul.f32 %v756, %v841
        %v863 = vmul.f32 %v757, %v845
        %v864 = vmul.f32 %v757, %v847
        %v865 = vmul.f32 %v758, %v851
        %v866 = vmul.f32 %v758, %v853
        %v867 = vmul.f32 %v759, %v857
        %v868 = vmul.f32 %v759, %v859
        %869 = vmatprep.subr.mxu0 %v862
        %870 = vmatpush1.msra.mxu0 %v861
        %871 = vmatprep.subr.mxu0 %v864
        %872 = vmatpush1.msra.mxu0 %v863
        %873 = vmatprep.subr.mxu0 %v866
        %874 = vmatpush1.msra.mxu0 %v865
        %875 = vmatprep.subr.mxu0 %v868
        %876 = vmatpush1.msra.mxu0 %v867
        %877 = vmatprep.subr.mxu0 0.0
        %878 = vmatpush1.msra.mxu0 0.0
        %879 = vmatprep.subr.mxu0 0.0
        %880 = vmatpush1.msra.mxu0 0.0
        %881 = vmatprep.subr.mxu0 0.0
        %882 = vmatpush1.msra.mxu0 0.0
        %883 = vmatprep.subr.mxu0 0.0
        %884 = vmatpush1.msra.mxu0 0.0
        %885 = vmatprep.subr.mxu0 0.0
        %886 = vmatpush1.msra.mxu0 0.0
        %887 = vmatprep.subr.mxu0 0.0
        %888 = vmatpush1.msra.mxu0 0.0
        %889 = vmatprep.subr.mxu0 0.0
        %890 = vmatpush1.msra.mxu0 0.0
        %891 = vmatprep.subr.mxu0 0.0
        %892 = vmatpush1.msra.mxu0 0.0
        %893 = vmatprep.subr.mxu0 0.0
        %894 = vmatpush1.msra.mxu0 0.0
        %895 = vmatprep.subr.mxu0 0.0
        %896 = vmatpush1.msra.mxu0 0.0
        %897 = vmatprep.subr.mxu0 0.0
        %898 = vmatpush1.msra.mxu0 0.0
        %899 = vmatprep.subr.mxu0 0.0
        %900 = vmatpush1.msra.mxu0 0.0
        %901 = vmatprep.subr.mxu0 0.0
        %902 = vmatpush1.msra.mxu0 0.0
        %903 = vmatprep.subr.mxu0 0.0
        %904 = vmatpush1.msra.mxu0 0.0
        %905 = vmatprep.subr.mxu0 0.0
        %906 = vmatpush1.msra.mxu0 0.0
        %907 = vmatprep.subr.mxu0 0.0
        %908 = vmatpush1.msra.mxu0 0.0
        %909 = vmatprep.subr.mxu0 0.0
        %910 = vmatpush1.msra.mxu0 0.0
        %911 = vmatprep.subr.mxu0 0.0
        %912 = vmatpush1.msra.mxu0 0.0
        %913 = vmatprep.subr.mxu0 0.0
        %914 = vmatpush1.msra.mxu0 0.0
        %915 = vmatprep.subr.mxu0 0.0
        %916 = vmatpush1.msra.mxu0 0.0
        %917 = vmatprep.subr.mxu0 0.0
        %918 = vmatpush1.msra.mxu0 0.0
        %919 = vmatprep.subr.mxu0 0.0
        %920 = vmatpush1.msra.mxu0 0.0
        %921 = vmatprep.subr.mxu0 0.0
        %922 = vmatpush1.msra.mxu0 0.0
        %923 = vmatprep.subr.mxu0 0.0
        %924 = vmatpush1.msra.mxu0 0.0
        %925 = vmatprep.subr.mxu0 0.0
        %926 = vmatpush1.msra.mxu0 0.0
        %927 = vmatprep.subr.mxu0 0.0
        %928 = vmatpush1.msra.mxu0 0.0
        %929 = vmatprep.subr.mxu0 0.0
        %930 = vmatpush1.msra.mxu0 0.0
        %931 = vmatprep.subr.mxu0 0.0
        %932 = vmatpush1.msra.mxu0 0.0
        %933 = vmatprep.mubr.f32.mxu0 0.0
        %934 = vmatmul.mubr.f32.gmra.mrb[0].mxu0 %v614
        %v935 = vpop.f32.mrb[0].mxu0
        %v936 = vadd.f32 0.0, %v935
        %v937 = vpop.f32.mrb[0].mxu0
        %v938 = vadd.f32 0.0, %v937
        %939 = vmatprep.mubr.f32.mxu0 0.0
        %940 = vmatmul.mubr.f32.gmra.mrb[0].mxu0 %v617
        %v941 = vpop.f32.mrb[0].mxu0
        %v942 = vadd.f32 0.0, %v941
        %v943 = vpop.f32.mrb[0].mxu0
        %v944 = vadd.f32 0.0, %v943
        %945 = vmatprep.mubr.f32.mxu0 0.0
        %946 = vmatmul.mubr.f32.gmra.mrb[0].mxu0 %v620
        %v947 = vpop.f32.mrb[0].mxu0
        %v948 = vadd.f32 0.0, %v947
        %v949 = vpop.f32.mrb[0].mxu0
        %v950 = vadd.f32 0.0, %v949
        %951 = vmatprep.mubr.f32.mxu0 0.0
        %952 = vmatmul.mubr.f32.gmra.mrb[0].mxu0 %v623
        %v953 = vpop.f32.mrb[0].mxu0
        %v954 = vadd.f32 0.0, %v953
        %v955 = vpop.f32.mrb[0].mxu0
        %v956 = vadd.f32 0.0, %v955
        %957 = vdwg.mxu0
        %v958 = vmul.f32 %v936, %v396
        %v959 = vmul.f32 %v938, %v396
        %v960 = vmul.f32 %v942, %v398
        %v961 = vmul.f32 %v944, %v398
        %v962 = vmul.f32 %v948, %v400
        %v963 = vmul.f32 %v950, %v400
        %v964 = vmul.f32 %v954, %v402
        %v965 = vmul.f32 %v956, %v402
        %v966 = vmul.f32 %v760, %v302
        %v967 = vmul.f32 %v761, %v307
        %v968 = vmul.f32 %v762, %v312
        %v969 = vmul.f32 %v763, %v317
        %v970 = vmul.f32 %v760, %v329
        %v971 = vmul.f32 %v761, %v333
        %v972 = vmul.f32 %v762, %v337
        %v973 = vmul.f32 %v763, %v341
        %v974 = vadd.f32 %v958, %v966
        %v975 = vadd.f32 %v959, %v970
        %v976 = vadd.f32 %v960, %v967
        %v977 = vadd.f32 %v961, %v971
        %v978 = vadd.f32 %v962, %v968
        %v979 = vadd.f32 %v963, %v972
        %v980 = vadd.f32 %v964, %v969
        %v981 = vadd.f32 %v965, %v973
        %v982 = vmul.f32 %v302, %v974
        %v983 = vmul.f32 %v302, %v975
        %v984 = vmul.f32 %v307, %v976
        %v985 = vmul.f32 %v307, %v977
        %v986 = vmul.f32 %v312, %v978
        %v987 = vmul.f32 %v312, %v979
        %v988 = vmul.f32 %v317, %v980
        %v989 = vmul.f32 %v317, %v981
        %v990 = vadd.f32 %v982, %v984
        %v991 = vadd.f32 %v990, %v986
        %v992 = vadd.f32 %v991, %v988
        %v993 = vrot.slane %v992, 4
        %v994 = vadd.f32 %v992, %v993
        %v995 = vrot.slane %v994, 2
        %v996 = vadd.f32 %v994, %v995
        %v997 = vrot.slane %v996, 1
        %v998 = vadd.f32 %v996, %v997
        %v999 = vadd.f32 %v983, %v985
        %v1000 = vadd.f32 %v999, %v987
        %v1001 = vadd.f32 %v1000, %v989
        %v1002 = vrot.slane %v1001, 4
        %v1003 = vadd.f32 %v1001, %v1002
        %v1004 = vrot.slane %v1003, 2
        %v1005 = vadd.f32 %v1003, %v1004
        %v1006 = vrot.slane %v1005, 1
        %v1007 = vadd.f32 %v1005, %v1006
        %v1008 = vmul.f32 %v329, %v974
        %v1009 = vmul.f32 %v329, %v975
        %v1010 = vmul.f32 %v333, %v976
        %v1011 = vmul.f32 %v333, %v977
        %v1012 = vmul.f32 %v337, %v978
        %v1013 = vmul.f32 %v337, %v979
        %v1014 = vmul.f32 %v341, %v980
        %v1015 = vmul.f32 %v341, %v981
        %v1016 = vadd.f32 %v1008, %v1010
        %v1017 = vadd.f32 %v1016, %v1012
        %v1018 = vadd.f32 %v1017, %v1014
        %v1019 = vrot.slane %v1018, 4
        %v1020 = vadd.f32 %v1018, %v1019
        %v1021 = vrot.slane %v1020, 2
        %v1022 = vadd.f32 %v1020, %v1021
        %v1023 = vrot.slane %v1022, 1
        %v1024 = vadd.f32 %v1022, %v1023
        %v1025 = vadd.f32 %v1009, %v1011
        %v1026 = vadd.f32 %v1025, %v1013
        %v1027 = vadd.f32 %v1026, %v1015
        %v1028 = vrot.slane %v1027, 4
        %v1029 = vadd.f32 %v1027, %v1028
        %v1030 = vrot.slane %v1029, 2
        %v1031 = vadd.f32 %v1029, %v1030
        %v1032 = vrot.slane %v1031, 1
        %v1033 = vadd.f32 %v1031, %v1032
        %v1034 = vsub.f32 0.0, %v726
        %v1035 = vsub.f32 0.0, %v998
        %v1036 = vsub.f32 0.0, %v1007
        %1037 = vst [vmem:[%s269] sm:$0x1] %v739
        %1038 = vst [vmem:[%s269 + $0x1] sm:$0x1] %v1034
        %1039 = vst [vmem:[%s269 + $0x2] sm:$0x1] %v1024
        %1040 = vst [vmem:[%s269 + $0x3] sm:$0x1] %v1033
        %1041 = vst [vmem:[%s269 + $0x4] sm:$0x1] %v1035
        %1042 = vst [vmem:[%s269 + $0x5] sm:$0x1] %v1036
        %s1043 = sand.u32 %s181, 1
        %s1044 = scalar_lea.sflag [#allocation3], %s1043
        %s1045 = sand.u32 %s181, 1
        %s1046 = smul.addr %s1045, 8
        %s1047 = scalar_lea.vmem [#allocation2], %s1046
        // Predicated region
        $region49: #{tpu_custom_call.1} parent=47 // pred_check
          %p1048 = pneg %p191
        $region50: #{tpu_custom_call.1} parent=47 // pred_check_branch
          %1050 = sbr.rel (%p1048) target = $region52
        $region51: #{tpu_custom_call.1} parent=47 // pred_region
          %s1052 = ssub.s32 128, 128
          %1053 = vsyncadd %s1044, %s1052
          %s1054 = smul.addr %s21, 128
          %s1055 = scalar_lea.hbm %s7, %s1054
          %s1057 = sshll.u32 %s1047, 4
          %s1058 = int_to_ptr.vmem [resolvable:$true] %s1057
          %1060 = dma.vmem_to_hbm [thread:$0]  %s1058, 128, %s1055, %s1044
        $region52: #{tpu_custom_call.1} parent=47 // pred_fallthru
          _
      $region48: #{tpu_custom_call.1} parent=5 // pred_fallthru
        _
      %p1061 = scmp.le.s32.totalorder 2, %s16
      // Predicated region
      $region53: #{tpu_custom_call.1} parent=5 // pred_check
        %p1062 = pneg %p1061
      $region54: #{tpu_custom_call.1} parent=5 // pred_check_branch
        %1064 = sbr.rel (%p1062) target = $region56
      $region55: #{tpu_custom_call.1} parent=5 // pred_region
        %s1065 = ssub.s32 %s16, 2
        // Predicated region
        $region57: #{tpu_custom_call.1} parent=55 // pred_check
          %p1066 = pneg %p197
        $region58: #{tpu_custom_call.1} parent=55 // pred_check_branch
          %1068 = sbr.rel (%p1066) target = $region60
        $region59: #{tpu_custom_call.1} parent=55 // pred_region
          %s1069 = sand.u32 %s182, 1
          %s1070 = scalar_lea.sflag [#allocation3], %s1069
          %s1071 = sand.u32 %s182, 1
          %s1072 = smul.addr %s1071, 8
          %s1073 = scalar_lea.vmem [#allocation2], %s1072
          %1074 = dma.done %s1070, 128
        $region60: #{tpu_custom_call.1} parent=55 // pred_fallthru
          _
      $region56: #{tpu_custom_call.1} parent=5 // pred_fallthru
        _
    $region6: #{tpu_custom_call.1} parent=1 // loop_footer
      %s20 = sadd.s32 1, %s16
    $region7: #{tpu_custom_call.1} parent=1 // loop_footer_branch
      %15 = sbr.rel target = $region3
    $region8: #{tpu_custom_call.1} parent=1 // loop_exit
      _
    %1075 = vsyncpa [#allocation3], 1
    %s1076 = scalar_lea.sflag [#allocation3], 1
    %1077 = vsyncpa %s1076, 1

</llo_original>
